<compile_context>
chip_gen: v7x
topology: tpu7x:2x2x1
jax: 0.10.0
libtpu: 0.0.40
codegen_flags: <defaults>
</compile_context>

<pallas_src>
import functools

import jax
import jax.numpy as jnp
from jax.experimental import pallas as pl
from jax.experimental.pallas import tpu as pltpu

LANE = 128      # lane width (last dim)
SUBLANE = 8     # sublane width (second-to-last dim)


def _round_up(x, m):
    return (x + m - 1) // m * m


def policy_kernel(x_ref, w1_ref, b1_ref, w2_ref, b2_ref, out_ref, *, hidden):
    # fc1 + ReLU: bf16 operands on the MXU, f32 accumulation, f32 bias/ReLU.
    h = jnp.dot(x_ref[...], w1_ref[...],
                preferred_element_type=jnp.float32) + b1_ref[...]
    h = jnp.maximum(h, 0.0)

    # fc2 -> logits (bf16 MXU operands again, f32 accumulate, f32 bias add).
    logits = jnp.dot(h.astype(jnp.bfloat16), w2_ref[...],
                     preferred_element_type=jnp.float32) + b2_ref[...]

    # Mask padded lanes so the softmax only runs over the real `hidden` outputs.
    col = jax.lax.broadcasted_iota(jnp.int32, logits.shape, 1)
    logits = jnp.where(col < hidden, logits, -1e30)

    # probs = exp(log_softmax(logits)) == softmax(logits), max-shifted for
    # stability; denominator reciprocal goes to the EUP (approx) slot.
    m = jnp.max(logits, axis=-1, keepdims=True)
    e = jnp.exp(logits - m)
    s = jnp.sum(e, axis=-1, keepdims=True)
    out_ref[...] = (e * pl.reciprocal(s, approx=True)).astype(out_ref.dtype)


@functools.partial(jax.jit, static_argnames=("tile_b",))
def policy_forward(x, w1, b1, w2, b2, *, tile_b=128):
    """x: (B, input).  w1: (input, hidden), w2: (hidden, hidden) (transposed vs
    PyTorch so the kernel computes y = x @ W + b).  Biases are (1, features)."""
    B, input_size = x.shape
    hidden = w1.shape[1]

    in_pad = _round_up(input_size, LANE)
    h_pad = _round_up(hidden, LANE)

    # Batch tile: multiple of 8 sublanes, capped so double-buffered activation
    # tiles stay far below even v7x's 64 MiB VMEM.
    tile_b = min(tile_b, _round_up(B, SUBLANE))
    b_pad = _round_up(B, tile_b)
    grid = (b_pad // tile_b,)

    # Zero-pad batch & feature dims.  Zero weight rows/cols + zero bias keep
    # fc1/fc2 exact on the padding; padded softmax lanes are masked in-kernel.
    xp = jnp.zeros((b_pad, in_pad), jnp.bfloat16).at[:B, :input_size].set(
        x.astype(jnp.bfloat16))
    w1p = jnp.zeros((in_pad, h_pad), jnp.bfloat16).at[:input_size, :hidden].set(
        w1.astype(jnp.bfloat16))
    b1p = jnp.zeros((1, h_pad), jnp.float32).at[:, :hidden].set(b1)
    w2p = jnp.zeros((h_pad, h_pad), jnp.bfloat16).at[:hidden, :hidden].set(
        w2.astype(jnp.bfloat16))
    b2p = jnp.zeros((1, h_pad), jnp.float32).at[:, :hidden].set(b2)

    cost = pl.CostEstimate(
        flops=2 * b_pad * (in_pad * h_pad + h_pad * h_pad),
        transcendentals=b_pad * h_pad,
        bytes_accessed=(xp.size * 2 + w1p.size * 2 + w2p.size * 2
                        + b1p.size * 4 + b2p.size * 4 + b_pad * h_pad * 4),
    )

    out = pl.pallas_call(
        functools.partial(policy_kernel, hidden=hidden),
        out_shape=jax.ShapeDtypeStruct((b_pad, h_pad), jnp.float32),
        grid=grid,
        in_specs=[
            pl.BlockSpec((tile_b, in_pad), lambda i: (i, 0)),   # x tile
            pl.BlockSpec((in_pad, h_pad), lambda i: (0, 0)),    # w1 (resident)
            pl.BlockSpec((1, h_pad), lambda i: (0, 0)),         # b1 (resident)
            pl.BlockSpec((h_pad, h_pad), lambda i: (0, 0)),     # w2 (resident)
            pl.BlockSpec((1, h_pad), lambda i: (0, 0)),         # b2 (resident)
        ],
        out_specs=pl.BlockSpec((tile_b, h_pad), lambda i: (i, 0)),
        compiler_params=pltpu.CompilerParams(
            dimension_semantics=("parallel",),
            vmem_limit_bytes=32 * 1024 * 1024,
        ),
        cost_estimate=cost,
    )(xp, w1p, b1p, w2p, b2p)

    return out[:B, :hidden]


def init_linear(key, fan_in, fan_out):
    """Mimic nn.Linear default init: U(-1/sqrt(fan_in), 1/sqrt(fan_in)).
    Weight returned as (fan_in, fan_out) (transposed vs PyTorch), bias (1, fan_out)."""
    kw, kb = jax.random.split(key)
    bound = 1.0 / jnp.sqrt(jnp.float32(fan_in))
    w = jax.random.uniform(kw, (fan_in, fan_out), jnp.float32, -bound, bound)
    b = jax.random.uniform(kb, (1, fan_out), jnp.float32, -bound, bound)
    return w, b


if __name__ == "__main__":
    # Small shapes consistent with the module: batch=8, input=16, hidden=32.
    # (output_size / fc3 is unused in the PyTorch forward pass.)
    B, INPUT, HIDDEN, OUTPUT = 8, 16, 32, 4

    key = jax.random.PRNGKey(0)
    kx, k1, k2, k3 = jax.random.split(key, 4)

    x = jax.random.normal(kx, (B, INPUT), jnp.float32)
    w1, b1 = init_linear(k1, INPUT, HIDDEN)
    w2, b2 = init_linear(k2, HIDDEN, HIDDEN)
    _w3, _b3 = init_linear(k3, HIDDEN, OUTPUT)  # fc3: params exist, unused in forward

    probs = jax.block_until_ready(policy_forward(x, w1, b1, w2, b2))

    # Reference in plain JAX (f32 math; kernel uses bf16 MXU operands and an
    # approx reciprocal, so tolerances are loosened accordingly).
    h_ref = jnp.maximum(x @ w1 + b1, 0.0)
    logits_ref = h_ref @ w2 + b2
    probs_ref = jax.nn.softmax(logits_ref, axis=-1)

    assert probs.shape == (B, HIDDEN)
    assert jnp.allclose(probs, probs_ref, atol=2e-2, rtol=2e-2), float(
        jnp.max(jnp.abs(probs - probs_ref)))
    assert jnp.allclose(jnp.sum(probs, axis=-1), 1.0, atol=1e-2)

    print("KERNEL_OK")
</pallas_src>

<mosaic_0001>
module attributes {stable_mosaic.version = 11 : i64} {
  func.func @policy_kernel(%arg0: i32, %arg1: memref<8x128xbf16, #tpu.memory_space<vmem>>, %arg2: memref<128x128xbf16, #tpu.memory_space<vmem>>, %arg3: memref<1x128xf32, #tpu.memory_space<vmem>>, %arg4: memref<128x128xbf16, #tpu.memory_space<vmem>>, %arg5: memref<1x128xf32, #tpu.memory_space<vmem>>, %arg6: memref<8x128xf32, #tpu.memory_space<vmem>>) attributes {dimension_semantics = [#tpu.dimension_semantics<parallel>], iteration_bounds = array<i64: 1>, scalar_prefetch = 0 : i64, scratch_operands = 0 : i64, tpu.core_type = #tpu.core_type<tc>, window_params = [{transform_indices = @transform_0, window_bounds = array<i64: 8, 128>}, {pipeline_mode = #tpu.pipeline_mode<synchronous>, transform_indices = @transform_1, window_bounds = array<i64: 128, 128>}, {pipeline_mode = #tpu.pipeline_mode<synchronous>, transform_indices = @transform_2, window_bounds = array<i64: 1, 128>}, {pipeline_mode = #tpu.pipeline_mode<synchronous>, transform_indices = @transform_3, window_bounds = array<i64: 128, 128>}, {pipeline_mode = #tpu.pipeline_mode<synchronous>, transform_indices = @transform_4, window_bounds = array<i64: 1, 128>}, {transform_indices = @transform_5, window_bounds = array<i64: 8, 128>}]} {
    %c0 = arith.constant 0 : index
    %c0_0 = arith.constant 0 : index
    %0 = vector.load %arg1[%c0, %c0_0] : memref<8x128xbf16, #tpu.memory_space<vmem>>, vector<8x128xbf16>
    %c0_1 = arith.constant 0 : index
    %c0_2 = arith.constant 0 : index
    %1 = vector.load %arg2[%c0_1, %c0_2] : memref<128x128xbf16, #tpu.memory_space<vmem>>, vector<128x128xbf16>
    %cst = arith.constant dense<0.000000e+00> : vector<8x128xf32>
    %2 = tpu.matmul %0, %1, %cst {dimension_numbers = #tpu.dot_dimension_numbers<[1], [0], [0], [1], [0, 0, 1, 1], [], []>} : vector<8x128xbf16>, vector<128x128xbf16>, vector<8x128xf32> -> vector<8x128xf32>
    %c0_3 = arith.constant 0 : index
    %c0_4 = arith.constant 0 : index
    %3 = vector.load %arg3[%c0_3, %c0_4] : memref<1x128xf32, #tpu.memory_space<vmem>>, vector<1x128xf32>
    %4 = vector.broadcast %3 : vector<1x128xf32> to vector<8x128xf32>
    %5 = arith.addf %2, %4 : vector<8x128xf32>
    %cst_5 = arith.constant 0.000000e+00 : f32
    %6 = vector.broadcast %cst_5 : f32 to vector<8x128xf32>
    %7 = arith.maximumf %5, %6 : vector<8x128xf32>
    %8 = arith.truncf %7 : vector<8x128xf32> to vector<8x128xbf16>
    %c0_6 = arith.constant 0 : index
    %c0_7 = arith.constant 0 : index
    %9 = vector.load %arg4[%c0_6, %c0_7] : memref<128x128xbf16, #tpu.memory_space<vmem>>, vector<128x128xbf16>
    %cst_8 = arith.constant dense<0.000000e+00> : vector<8x128xf32>
    %10 = tpu.matmul %8, %9, %cst_8 {dimension_numbers = #tpu.dot_dimension_numbers<[1], [0], [0], [1], [0, 0, 1, 1], [], []>} : vector<8x128xbf16>, vector<128x128xbf16>, vector<8x128xf32> -> vector<8x128xf32>
    %c0_9 = arith.constant 0 : index
    %c0_10 = arith.constant 0 : index
    %11 = vector.load %arg5[%c0_9, %c0_10] : memref<1x128xf32, #tpu.memory_space<vmem>>, vector<1x128xf32>
    %12 = vector.broadcast %11 : vector<1x128xf32> to vector<8x128xf32>
    %13 = arith.addf %10, %12 : vector<8x128xf32>
    %14 = tpu.iota {dimensions = array<i32: 1>} : vector<8x128xi32>
    %c32_i32 = arith.constant 32 : i32
    %15 = vector.broadcast %c32_i32 : i32 to vector<8x128xi32>
    %16 = arith.cmpi slt, %14, %15 : vector<8x128xi32>
    %cst_11 = arith.constant -1.000000e+30 : f32
    %17 = vector.broadcast %cst_11 : f32 to vector<8x128xf32>
    %18 = arith.select %16, %13, %17 : vector<8x128xi1>, vector<8x128xf32>
    %cst_12 = arith.constant dense<0xFF800000> : vector<8xf32>
    %19 = vector.multi_reduction <maximumf>, %18, %cst_12 [1] : vector<8x128xf32> to vector<8xf32>
    %20 = vector.shape_cast %19 : vector<8xf32> to vector<8x1xf32>
    %21 = vector.broadcast %20 : vector<8x1xf32> to vector<8x128xf32>
    %22 = arith.subf %18, %21 : vector<8x128xf32>
    %23 = math.exp %22 : vector<8x128xf32>
    %cst_13 = arith.constant dense<0.000000e+00> : vector<8xf32>
    %24 = vector.multi_reduction <add>, %23, %cst_13 [1] : vector<8x128xf32> to vector<8xf32>
    %25 = vector.shape_cast %24 : vector<8xf32> to vector<8x1xf32>
    %26 = tpu.reciprocal %25 {approx = true} : vector<8x1xf32> -> vector<8x1xf32>
    %27 = vector.broadcast %26 : vector<8x1xf32> to vector<8x128xf32>
    %28 = arith.mulf %23, %27 : vector<8x128xf32>
    %c0_14 = arith.constant 0 : index
    %c0_15 = arith.constant 0 : index
    %29 = vector.load %arg6[%c0_14, %c0_15] : memref<8x128xf32, #tpu.memory_space<vmem>>, vector<8x128xf32>
    tpu.vector_store %arg6[%c0_14, %c0_15], %28 {strides = array<i32>} : memref<8x128xf32, #tpu.memory_space<vmem>>, vector<8x128xf32>,
    return
  }
  func.func @transform_0(%arg0: i32) -> (i32, i32) {
    %c0_i32 = arith.constant 0 : i32
    %c0_i32_0 = arith.constant 0 : i32
    return %arg0, %c0_i32 : i32, i32
  }
  func.func @transform_1(%arg0: i32) -> (i32, i32) {
    %c0_i32 = arith.constant 0 : i32
    %c0_i32_0 = arith.constant 0 : i32
    %c0_i32_1 = arith.constant 0 : i32
    return %c0_i32, %c0_i32_0 : i32, i32
  }
  func.func @transform_2(%arg0: i32) -> (i32, i32) {
    %c0_i32 = arith.constant 0 : i32
    %c0_i32_0 = arith.constant 0 : i32
    %c0_i32_1 = arith.constant 0 : i32
    return %c0_i32, %c0_i32_0 : i32, i32
  }
  func.func @transform_3(%arg0: i32) -> (i32, i32) {
    %c0_i32 = arith.constant 0 : i32
    %c0_i32_0 = arith.constant 0 : i32
    %c0_i32_1 = arith.constant 0 : i32
    return %c0_i32, %c0_i32_0 : i32, i32
  }
  func.func @transform_4(%arg0: i32) -> (i32, i32) {
    %c0_i32 = arith.constant 0 : i32
    %c0_i32_0 = arith.constant 0 : i32
    %c0_i32_1 = arith.constant 0 : i32
    return %c0_i32, %c0_i32_0 : i32, i32
  }
  func.func @transform_5(%arg0: i32) -> (i32, i32) {
    %c0_i32 = arith.constant 0 : i32
    %c0_i32_0 = arith.constant 0 : i32
    return %arg0, %c0_i32 : i32, i32
  }
}

</mosaic_0001>

<llo_original>
// kernel: policy_forward.1
$region0: #{policy_forward.1}
  #allocation0 [shape = 'u32[]', space=smem, size = 0x4, offset = 0x4, fixed_abs, tag = 'smem constant byte address 0x4 - core index']
  #allocation1 [shape = 'u32[144,128]{1,0:T(1,128)}', space=vmem, size = 0x12000, scoped, tag = 'internal scratch']
  %s0 = inlined_call_operand.vmem [shape: bf16[8,128], index: 0, kind: input, shape index: {}]
  %s1 = inlined_call_operand.vmem [shape: bf16[128,128], index: 1, kind: input, shape index: {}]
  %s2 = inlined_call_operand.vmem [shape: f32[1,128], index: 2, kind: input, shape index: {}]
  %s3 = inlined_call_operand.vmem [shape: bf16[128,128], index: 3, kind: input, shape index: {}]
  %s4 = inlined_call_operand.vmem [shape: f32[1,128], index: 4, kind: input, shape index: {}]
  %s5 = inlined_call_operand.hbm [shape: f32[8,128], index: 5, kind: output, shape index: {}]
  %s6 = sld [smem:[#allocation0]]
  $region30: #{policy_forward.1} parent=0
    _
  %s8 = ssub.s32 1, %s6
  %s9 = scalar_select 0, %s8, %s6
  $region1: #{policy_forward.1} parent=0
    #allocation2 [shape = 'u8[4096]{0}', space=vmem, size = 0x1000, scoped, tag = 'output window, operand 0, single buffered']
    #allocation3 [shape = 's32[1]{0}', space=sflag, size = 0x4, scoped, tag = 'scoped memory for policy_forward.1']
    %10 = vsyncpa [#allocation3], 0
    // Predicated region
    $region2: #{policy_forward.1} parent=1 // pred_check
      _
    $region3: #{policy_forward.1} parent=1 // pred_check_branch
      %12 = sbr.rel (0) target = $region5
    $region4: #{policy_forward.1} parent=1 // pred_region
      _
    $region5: #{policy_forward.1} parent=1 // pred_fallthru
      _
    // Predicated region
    $region6: #{policy_forward.1} parent=1 // pred_check
      _
    $region7: #{policy_forward.1} parent=1 // pred_check_branch
      %14 = sbr.rel (0) target = $region9
    $region8: #{policy_forward.1} parent=1 // pred_region
      _
    $region9: #{policy_forward.1} parent=1 // pred_fallthru
      _
    // Predicated region
    $region10: #{policy_forward.1} parent=1 // pred_check
      _
    $region11: #{policy_forward.1} parent=1 // pred_check_branch
      %16 = sbr.rel (0) target = $region13
    $region12: #{policy_forward.1} parent=1 // pred_region
      _
    $region13: #{policy_forward.1} parent=1 // pred_fallthru
      _
    // Predicated region
    $region14: #{policy_forward.1} parent=1 // pred_check
      _
    $region15: #{policy_forward.1} parent=1 // pred_check_branch
      %18 = sbr.rel (0) target = $region17
    $region16: #{policy_forward.1} parent=1 // pred_region
      _
    $region17: #{policy_forward.1} parent=1 // pred_fallthru
      _
    // Predicated region
    $region18: #{policy_forward.1} parent=1 // pred_check
      _
    $region19: #{policy_forward.1} parent=1 // pred_check_branch
      %20 = sbr.rel (0) target = $region21
    $region20: #{policy_forward.1} parent=1 // pred_region
      _
    $region21: #{policy_forward.1} parent=1 // pred_fallthru
      _
    %v22 = vld [vmem:[%s0] sm:$0xf]
    %v23 = vld [vmem:[%s1] sm:$0xf]
    %v24 = vld [vmem:[%s1 + $0x4] sm:$0xf]
    %v25 = vld [vmem:[%s1 + $0x8] sm:$0xf]
    %v26 = vld [vmem:[%s1 + $0xc] sm:$0xf]
    %v27 = vld [vmem:[%s1 + $0x10] sm:$0xf]
    %v28 = vld [vmem:[%s1 + $0x14] sm:$0xf]
    %v29 = vld [vmem:[%s1 + $0x18] sm:$0xf]
    %v30 = vld [vmem:[%s1 + $0x1c] sm:$0xf]
    %v31 = vld [vmem:[%s1 + $0x20] sm:$0xf]
    %v32 = vld [vmem:[%s1 + $0x24] sm:$0xf]
    %v33 = vld [vmem:[%s1 + $0x28] sm:$0xf]
    %v34 = vld [vmem:[%s1 + $0x2c] sm:$0xf]
    %v35 = vld [vmem:[%s1 + $0x30] sm:$0xf]
    %v36 = vld [vmem:[%s1 + $0x34] sm:$0xf]
    %v37 = vld [vmem:[%s1 + $0x38] sm:$0xf]
    %v38 = vld [vmem:[%s1 + $0x3c] sm:$0xf]
    %v39 = vld [vmem:[%s2] sm:$0x1]
    %v41 = vlaneseq
    %v42 = vshrl.u32 %v41, 7
    %v43 = vsub.s32 0, %v42
    %v44 = vrot.slane %v39, %v43
    %v62 = vunpack.c.l.b16 %v23
    %v63 = vunpack.c.l.b16 %v24
    %v64 = vunpack.c.l.b16 %v25
    %v65 = vunpack.c.l.b16 %v26
    %v66 = vunpack.c.l.b16 %v27
    %v67 = vunpack.c.l.b16 %v28
    %v68 = vunpack.c.l.b16 %v29
    %v69 = vunpack.c.l.b16 %v30
    %v70 = vunpack.c.l.b16 %v31
    %v71 = vunpack.c.l.b16 %v32
    %v72 = vunpack.c.l.b16 %v33
    %v73 = vunpack.c.l.b16 %v34
    %v74 = vunpack.c.l.b16 %v35
    %v75 = vunpack.c.l.b16 %v36
    %v76 = vunpack.c.l.b16 %v37
    %v77 = vunpack.c.l.b16 %v38
    %v78 = vpack.c.b16 %v63, %v62
    %v79 = vpack.c.b16 %v65, %v64
    %v80 = vpack.c.b16 %v67, %v66
    %v81 = vpack.c.b16 %v69, %v68
    %v82 = vpack.c.b16 %v71, %v70
    %v83 = vpack.c.b16 %v73, %v72
    %v84 = vpack.c.b16 %v75, %v74
    %v85 = vpack.c.b16 %v77, %v76
    %94 = vmatprep.subr.bf16.mxu0 0
    %95 = vmatpush1.bf16.msra.mxu0 %v78
    %96 = vmatprep.subr.bf16.mxu0 0
    %97 = vmatpush1.bf16.msra.mxu0 %v79
    %98 = vmatprep.subr.bf16.mxu0 0
    %99 = vmatpush1.bf16.msra.mxu0 %v80
    %100 = vmatprep.subr.bf16.mxu0 0
    %101 = vmatpush1.bf16.msra.mxu0 %v81
    %102 = vmatprep.subr.bf16.mxu0 0
    %103 = vmatpush1.bf16.msra.mxu0 %v82
    %104 = vmatprep.subr.bf16.mxu0 0
    %105 = vmatpush1.bf16.msra.mxu0 %v83
    %106 = vmatprep.subr.bf16.mxu0 0
    %107 = vmatpush1.bf16.msra.mxu0 %v84
    %108 = vmatprep.subr.bf16.mxu0 0
    %109 = vmatpush1.bf16.msra.mxu0 %v85
    %110 = vmatprep.subr.bf16.mxu0 0
    %111 = vmatpush1.bf16.msra.mxu0 0
    %112 = vmatprep.subr.bf16.mxu0 0
    %113 = vmatpush1.bf16.msra.mxu0 0
    %114 = vmatprep.subr.bf16.mxu0 0
    %115 = vmatpush1.bf16.msra.mxu0 0
    %116 = vmatprep.subr.bf16.mxu0 0
    %117 = vmatpush1.bf16.msra.mxu0 0
    %118 = vmatprep.subr.bf16.mxu0 0
    %119 = vmatpush1.bf16.msra.mxu0 0
    %120 = vmatprep.subr.bf16.mxu0 0
    %121 = vmatpush1.bf16.msra.mxu0 0
    %122 = vmatprep.subr.bf16.mxu0 0
    %123 = vmatpush1.bf16.msra.mxu0 0
    %124 = vmatprep.subr.bf16.mxu0 0
    %125 = vmatpush1.bf16.msra.mxu0 0
    %126 = vmatprep.mubr.bf16.mxu0 0
    %127 = vmatmul.mubr.bf16.gmra.mrb[0].mxu0 %v22
    %v128 = vpop.f32.mrb[0].mxu0
    %v129 = vadd.f32 %v44, %v128
    %v130 = vpop.f32.mrb[0].mxu0
    %v131 = vpop.f32.mrb[0].mxu0
    %v132 = vpop.f32.mrb[0].mxu0
    %133 = vdwg.mxu0
    %v134 = vmax.f32 %v129, 0.0
    %v135 = vpack.c.bf16 %v134, %v134
    %v136 = vld [vmem:[%s3] sm:$0xf]
    %v137 = vld [vmem:[%s3 + $0x4] sm:$0xf]
    %v138 = vld [vmem:[%s3 + $0x8] sm:$0xf]
    %v139 = vld [vmem:[%s3 + $0xc] sm:$0xf]
    %v140 = vld [vmem:[%s3 + $0x10] sm:$0xf]
    %v141 = vld [vmem:[%s3 + $0x14] sm:$0xf]
    %v142 = vld [vmem:[%s3 + $0x18] sm:$0xf]
    %v143 = vld [vmem:[%s3 + $0x1c] sm:$0xf]
    %v144 = vld [vmem:[%s3 + $0x20] sm:$0xf]
    %v145 = vld [vmem:[%s3 + $0x24] sm:$0xf]
    %v146 = vld [vmem:[%s3 + $0x28] sm:$0xf]
    %v147 = vld [vmem:[%s3 + $0x2c] sm:$0xf]
    %v148 = vld [vmem:[%s3 + $0x30] sm:$0xf]
    %v149 = vld [vmem:[%s3 + $0x34] sm:$0xf]
    %v150 = vld [vmem:[%s3 + $0x38] sm:$0xf]
    %v151 = vld [vmem:[%s3 + $0x3c] sm:$0xf]
    %v152 = vld [vmem:[%s4] sm:$0x1]
    %v154 = vlaneseq
    %v155 = vshrl.u32 %v154, 7
    %v156 = vsub.s32 0, %v155
    %v157 = vrot.slane %v152, %v156
    %v175 = vunpack.c.l.b16 %v136
    %v176 = vunpack.c.l.b16 %v137
    %v177 = vunpack.c.l.b16 %v138
    %v178 = vunpack.c.l.b16 %v139
    %v179 = vunpack.c.l.b16 %v140
    %v180 = vunpack.c.l.b16 %v141
    %v181 = vunpack.c.l.b16 %v142
    %v182 = vunpack.c.l.b16 %v143
    %v183 = vunpack.c.l.b16 %v144
    %v184 = vunpack.c.l.b16 %v145
    %v185 = vunpack.c.l.b16 %v146
    %v186 = vunpack.c.l.b16 %v147
    %v187 = vunpack.c.l.b16 %v148
    %v188 = vunpack.c.l.b16 %v149
    %v189 = vunpack.c.l.b16 %v150
    %v190 = vunpack.c.l.b16 %v151
    %v191 = vpack.c.b16 %v176, %v175
    %v192 = vpack.c.b16 %v178, %v177
    %v193 = vpack.c.b16 %v180, %v179
    %v194 = vpack.c.b16 %v182, %v181
    %v195 = vpack.c.b16 %v184, %v183
    %v196 = vpack.c.b16 %v186, %v185
    %v197 = vpack.c.b16 %v188, %v187
    %v198 = vpack.c.b16 %v190, %v189
    %207 = vmatprep.subr.bf16.mxu0 0
    %208 = vmatpush1.bf16.msra.mxu0 %v191
    %209 = vmatprep.subr.bf16.mxu0 0
    %210 = vmatpush1.bf16.msra.mxu0 %v192
    %211 = vmatprep.subr.bf16.mxu0 0
    %212 = vmatpush1.bf16.msra.mxu0 %v193
    %213 = vmatprep.subr.bf16.mxu0 0
    %214 = vmatpush1.bf16.msra.mxu0 %v194
    %215 = vmatprep.subr.bf16.mxu0 0
    %216 = vmatpush1.bf16.msra.mxu0 %v195
    %217 = vmatprep.subr.bf16.mxu0 0
    %218 = vmatpush1.bf16.msra.mxu0 %v196
    %219 = vmatprep.subr.bf16.mxu0 0
    %220 = vmatpush1.bf16.msra.mxu0 %v197
    %221 = vmatprep.subr.bf16.mxu0 0
    %222 = vmatpush1.bf16.msra.mxu0 %v198
    %223 = vmatprep.subr.bf16.mxu0 0
    %224 = vmatpush1.bf16.msra.mxu0 0
    %225 = vmatprep.subr.bf16.mxu0 0
    %226 = vmatpush1.bf16.msra.mxu0 0
    %227 = vmatprep.subr.bf16.mxu0 0
    %228 = vmatpush1.bf16.msra.mxu0 0
    %229 = vmatprep.subr.bf16.mxu0 0
    %230 = vmatpush1.bf16.msra.mxu0 0
    %231 = vmatprep.subr.bf16.mxu0 0
    %232 = vmatpush1.bf16.msra.mxu0 0
    %233 = vmatprep.subr.bf16.mxu0 0
    %234 = vmatpush1.bf16.msra.mxu0 0
    %235 = vmatprep.subr.bf16.mxu0 0
    %236 = vmatpush1.bf16.msra.mxu0 0
    %237 = vmatprep.subr.bf16.mxu0 0
    %238 = vmatpush1.bf16.msra.mxu0 0
    %239 = vmatprep.mubr.bf16.mxu0 0
    %240 = vmatmul.mubr.bf16.gmra.mrb[0].mxu0 %v135
    %v241 = vpop.f32.mrb[0].mxu0
    %v242 = vadd.f32 %v157, %v241
    %v243 = vpop.f32.mrb[0].mxu0
    %v244 = vpop.f32.mrb[0].mxu0
    %v245 = vpop.f32.mrb[0].mxu0
    %246 = vdwg.mxu0
    %v247 = vlaneseq
    %v248 = vand.u32 %v247, 127
    %vm249 = vcmp.lt.s32.totalorder %v248, 32
    %v250 = vsel %vm249, %v242, -1e+30
    %251 = vmax.xlane.f32.xlu0 %v250
    %v252 = vpop.xlane.xlu0 %251
    %v253 = vsub.f32 %v250, %v252
    %v254 = vmul.f32 %v253, 1.442695
    %v255 = vpow.pop %v254
    %256 = vadd.xlane.f32.xlu0 %v255
    %v257 = vpop.xlane.xlu0 %256
    %v258 = vrcp.pop %v257
    %v259 = vmul.f32 %v255, %v258
    %260 = vst [vmem:[#allocation2] sm:$0xff] %v259
    // Predicated region
    $region22: #{policy_forward.1} parent=1 // pred_check
      _
    $region23: #{policy_forward.1} parent=1 // pred_check_branch
      %262 = sbr.rel (0) target = $region25
    $region24: #{policy_forward.1} parent=1 // pred_region
      %s264 = ssub.s32 128, 128
      %265 = vsyncadd [#allocation3], %s264
      %s267 = sshll.u32 [#allocation2], 4
      %s268 = int_to_ptr.vmem [resolvable:$true] %s267
      %270 = dma.vmem_to_hbm [thread:$0]  %s268, 128, %s5, [#allocation3]
    $region25: #{policy_forward.1} parent=1 // pred_fallthru
      _
    // Predicated region
    $region26: #{policy_forward.1} parent=1 // pred_check
      _
    $region27: #{policy_forward.1} parent=1 // pred_check_branch
      %272 = sbr.rel (0) target = $region29
    $region28: #{policy_forward.1} parent=1 // pred_region
      %273 = dma.done [#allocation3], 128
    $region29: #{policy_forward.1} parent=1 // pred_fallthru
      _
    %274 = vsyncpa [#allocation3], 1

</llo_original>
